<compile_context>
chip_gen: v6e
topology: v6e:2x2x1
jax: 0.10.0
libtpu: 0.0.40
codegen_flags: <defaults>
</compile_context>

<pallas_src>
import functools

import jax
import jax.numpy as jnp
from jax.experimental import pallas as pl
from jax.experimental.pallas import tpu as pltpu


def _round_up(x, m):
    return int(pl.cdiv(x, m) * m)


def _vmem_capacity_bytes():
    try:
        return int(pltpu.get_tpu_info().vmem_capacity_bytes)
    except Exception:
        return 64 * 1024 * 1024  # v7x per-TC capacity: safe lower bound


def sage_kernel(src_ref, nbr_ref, wcat_ref, o_ref, x_ref, *, k, apply_relu):
    """One row tile: act([src | sum_k(nbr)] @ [W_self ; W_nbr/K])."""
    d = src_ref.shape[1]
    # Fused MXU operand, first half: self features.
    x_ref[:, :d] = src_ref[...]
    # K-way neighbor sum as static lane-slice adds (1/K is folded into W_cat).
    aggr = nbr_ref[:, :d]
    for j in range(1, k):
        aggr = aggr + nbr_ref[:, j * d:(j + 1) * d]
    x_ref[:, d:] = aggr
    # Single 2*d-deep matmul on the MXU with f32 accumulation.
    out = jnp.dot(x_ref[...], wcat_ref[...], preferred_element_type=jnp.float32)
    if apply_relu:
        out = jnp.maximum(out, 0.0)
    o_ref[...] = out.astype(o_ref.dtype)


def _make_wcat(w_self, w_nbr, d_cur, dout_p, k, cd):
    """[W_self ; W_nbr * (1/K)] padded to the current (lane-dense) widths."""
    din, dout = w_self.shape
    w = jnp.zeros((2 * d_cur, dout_p), jnp.float32)
    w = w.at[:din, :dout].set(w_self.astype(jnp.float32))
    w = w.at[d_cur:d_cur + din, :dout].set(
        w_nbr.astype(jnp.float32) * (1.0 / k))
    return w.astype(cd)


def sage_layer(src, nbr_flat, w_cat, *, k, apply_relu, tm_max=512,
               min_grid_steps=4):
    """src: [N, D], nbr_flat: [N, K*D], w_cat: [2*D, Dout_p] -> [N, Dout_p]."""
    n, d = src.shape
    dout_p = w_cat.shape[1]
    cd = src.dtype
    itemsize = jnp.dtype(cd).itemsize
    lane = 128

    # ---- tile sizing against the real (lane-rounded) VMEM footprint --------
    cap = _vmem_capacity_bytes()
    budget = int(0.60 * cap)  # headroom for compiler-internal scratch
    per_row = (2 * (_round_up(d, lane) + _round_up(k * d, lane)) * itemsize  # src+nbr, dbl-buffered
               + 2 * dout_p * itemsize                                       # out tile, dbl-buffered
               + _round_up(2 * d, lane) * itemsize                           # fused-operand scratch
               + dout_p * 4)                                                 # f32 matmul result
    fixed = 2 * _round_up(2 * d, 8) * dout_p * itemsize                      # resident W_cat (2 bufs)
    tm_from_vmem = max(8, ((budget - fixed) // per_row) // 8 * 8)
    tm_from_steps = _round_up(int(pl.cdiv(n, min_grid_steps)), 8)            # >=4 steps -> v7x megacore
    tm = max(8, min(int(tm_max), tm_from_vmem, tm_from_steps, _round_up(n, 8)))

    est = fixed + tm * per_row
    vmem_limit = int(min(int(0.85 * cap),
                         max(16 * 1024 * 1024, int(1.5 * est) + (2 << 20))))

    kernel = functools.partial(sage_kernel, k=k, apply_relu=apply_relu)
    return pl.pallas_call(
        kernel,
        out_shape=jax.ShapeDtypeStruct((n, dout_p), cd),
        grid=(int(pl.cdiv(n, tm)),),
        in_specs=[
            pl.BlockSpec((tm, d), lambda i: (i, 0)),          # src rows (stream, native width)
            pl.BlockSpec((tm, k * d), lambda i: (i, 0)),      # flat neighbors (stream)
            pl.BlockSpec((2 * d, dout_p), lambda i: (0, 0)),  # fused weights (resident)
        ],
        out_specs=pl.BlockSpec((tm, dout_p), lambda i: (i, 0)),  # lane-dense output
        scratch_shapes=[pltpu.VMEM((tm, 2 * d), cd)],            # fused MXU operand
        compiler_params=pltpu.CompilerParams(
            dimension_semantics=("parallel",),
            vmem_limit_bytes=vmem_limit,
        ),
    )(src, nbr_flat, w_cat)


def graphsage_forward(node_feature_list, params, num_neighbors_list, *,
                      compute_dtype=jnp.float32, tm_max=512):
    """Mirrors GraphSAGE.forward: params[i] = (W_self, W_nbr, apply_relu)."""
    cd = compute_dtype
    num_layers = len(num_neighbors_list)
    # One-time cast of the raw features; hidden tensors then stay in
    # compute_dtype and their lane-padded width across all layers.
    hidden = [f.astype(cd) for f in node_feature_list]
    # TODO(synk): mid-hop tensors are still streamed twice per layer (once as
    # src, once as neighbors); fusing both roles into one pass is a larger
    # structural change left for a follow-up.
    for i in range(num_layers):
        w_self, w_nbr, apply_relu = params[i]
        dout_p = _round_up(w_self.shape[1], 128)
        next_hidden = []
        for hop in range(num_layers - i):
            src = hidden[hop]
            k = num_neighbors_list[hop]
            n_src, d_cur = src.shape
            nbr_flat = hidden[hop + 1].reshape(n_src, k * d_cur)
            w_cat = _make_wcat(w_self, w_nbr, d_cur, dout_p, k, cd)
            next_hidden.append(
                sage_layer(src, nbr_flat, w_cat, k=k, apply_relu=apply_relu,
                           tm_max=tm_max))
        hidden = next_hidden
    # Single slice / cast back to the true width at the very end.
    dout_final = params[-1][0].shape[1]
    return hidden[0][:, :dout_final].astype(jnp.float32)


def graphsage_reference(node_feature_list, params, num_neighbors_list):
    """Pure-JAX reference of the same forward (for correctness checking)."""
    hidden = list(node_feature_list)
    num_layers = len(num_neighbors_list)
    for i in range(num_layers):
        w_self, w_nbr, apply_relu = params[i]
        next_hidden = []
        for hop in range(num_layers - i):
            src = hidden[hop]
            n_src = src.shape[0]
            nbr = hidden[hop + 1].reshape(n_src, num_neighbors_list[hop], -1)
            h = src @ w_self + jnp.mean(nbr, axis=1) @ w_nbr
            if apply_relu:
                h = jnp.maximum(h, 0.0)
            next_hidden.append(h)
        hidden = next_hidden
    return hidden[0]


if __name__ == "__main__":
    # Small shapes consistent with the module: 2 SAGEGCN layers, 2-hop sampling.
    input_dim = 16
    hidden_dims = [32, 32]
    num_neighbors_list = [5, 5]
    n0 = 4  # number of target (hop-0) nodes

    key = jax.random.PRNGKey(0)
    k0, k1, k2, kw0s, kw0n, kw1s, kw1n = jax.random.split(key, 7)

    # node_feature_list: hop-0 nodes, their sampled neighbors, and 2-hop neighbors.
    feats = [
        jax.random.normal(k0, (n0, input_dim), jnp.float32),
        jax.random.normal(k1, (n0 * num_neighbors_list[0], input_dim), jnp.float32),
        jax.random.normal(
            k2, (n0 * num_neighbors_list[0] * num_neighbors_list[1], input_dim),
            jnp.float32),
    ]

    def glorot(k, din, dout):
        return jax.random.normal(k, (din, dout), jnp.float32) / jnp.sqrt(din)

    # Layer 0: input_dim -> hidden_dims[0], ReLU. Layer 1: -> hidden_dims[1], no act.
    params = [
        (glorot(kw0s, input_dim, hidden_dims[0]),
         glorot(kw0n, input_dim, hidden_dims[0]), True),
        (glorot(kw1s, hidden_dims[0], hidden_dims[1]),
         glorot(kw1n, hidden_dims[0], hidden_dims[1]), False),
    ]

    out = graphsage_forward(feats, params, num_neighbors_list)
    out = jax.block_until_ready(out)
    ref = graphsage_reference(feats, params, num_neighbors_list)

    assert out.shape == (n0, hidden_dims[-1])
    assert jnp.allclose(out, ref, atol=1e-4, rtol=1e-4), \
        float(jnp.max(jnp.abs(out - ref)))

    # bf16 streaming fast path (f32 accumulation / f32 epilogue) -- looser check.
    out_bf16 = jax.block_until_ready(
        graphsage_forward(feats, params, num_neighbors_list,
                          compute_dtype=jnp.bfloat16))
    assert out_bf16.shape == (n0, hidden_dims[-1])
    assert jnp.allclose(out_bf16, ref, atol=1e-1, rtol=1e-1)

    print("KERNEL_OK")
</pallas_src>

<mosaic_0001>
module attributes {stable_mosaic.version = 11 : i64} {
  func.func @sage_kernel(%arg0: i32, %arg1: memref<8x16xf32, #tpu.memory_space<vmem>>, %arg2: memref<8x80xf32, #tpu.memory_space<vmem>>, %arg3: memref<32x128xf32, #tpu.memory_space<vmem>>, %arg4: memref<8x128xf32, #tpu.memory_space<vmem>>, %arg5: memref<8x32xf32, #tpu.memory_space<vmem>>) attributes {dimension_semantics = [#tpu.dimension_semantics<parallel>], iteration_bounds = array<i64: 1>, scalar_prefetch = 0 : i64, scratch_operands = 1 : i64, tpu.core_type = #tpu.core_type<tc>, window_params = [{transform_indices = @transform_0, window_bounds = array<i64: 8, 16>}, {transform_indices = @transform_1, window_bounds = array<i64: 8, 80>}, {pipeline_mode = #tpu.pipeline_mode<synchronous>, transform_indices = @transform_2, window_bounds = array<i64: 32, 128>}, {transform_indices = @transform_3, window_bounds = array<i64: 8, 128>}]} {
    %c0 = arith.constant 0 : index
    %c0_0 = arith.constant 0 : index
    %0 = vector.load %arg1[%c0, %c0_0] : memref<8x16xf32, #tpu.memory_space<vmem>>, vector<8x16xf32>
    %c0_1 = arith.constant 0 : index
    %c0_2 = arith.constant 0 : index
    %1 = vector.load %arg5[%c0_1, %c0_2] : memref<8x32xf32, #tpu.memory_space<vmem>>, vector<8x16xf32>
    tpu.vector_store %arg5[%c0_1, %c0_2], %0 {strides = array<i32>} : memref<8x32xf32, #tpu.memory_space<vmem>>, vector<8x16xf32>,
    %c0_3 = arith.constant 0 : index
    %c0_4 = arith.constant 0 : index
    %2 = vector.load %arg2[%c0_3, %c0_4] : memref<8x80xf32, #tpu.memory_space<vmem>>, vector<8x16xf32>
    %c0_5 = arith.constant 0 : index
    %c16 = arith.constant 16 : index
    %3 = vector.load %arg2[%c0_5, %c16] : memref<8x80xf32, #tpu.memory_space<vmem>>, vector<8x16xf32>
    %4 = arith.addf %2, %3 : vector<8x16xf32>
    %c0_6 = arith.constant 0 : index
    %c32 = arith.constant 32 : index
    %5 = vector.load %arg2[%c0_6, %c32] : memref<8x80xf32, #tpu.memory_space<vmem>>, vector<8x16xf32>
    %6 = arith.addf %4, %5 : vector<8x16xf32>
    %c0_7 = arith.constant 0 : index
    %c48 = arith.constant 48 : index
    %7 = vector.load %arg2[%c0_7, %c48] : memref<8x80xf32, #tpu.memory_space<vmem>>, vector<8x16xf32>
    %8 = arith.addf %6, %7 : vector<8x16xf32>
    %c0_8 = arith.constant 0 : index
    %c64 = arith.constant 64 : index
    %9 = vector.load %arg2[%c0_8, %c64] : memref<8x80xf32, #tpu.memory_space<vmem>>, vector<8x16xf32>
    %10 = arith.addf %8, %9 : vector<8x16xf32>
    %c0_9 = arith.constant 0 : index
    %c16_10 = arith.constant 16 : index
    %11 = vector.load %arg5[%c0_9, %c16_10] : memref<8x32xf32, #tpu.memory_space<vmem>>, vector<8x16xf32>
    tpu.vector_store %arg5[%c0_9, %c16_10], %10 {strides = array<i32>} : memref<8x32xf32, #tpu.memory_space<vmem>>, vector<8x16xf32>,
    %c0_11 = arith.constant 0 : index
    %c0_12 = arith.constant 0 : index
    %12 = vector.load %arg5[%c0_11, %c0_12] : memref<8x32xf32, #tpu.memory_space<vmem>>, vector<8x32xf32>
    %c0_13 = arith.constant 0 : index
    %c0_14 = arith.constant 0 : index
    %13 = vector.load %arg3[%c0_13, %c0_14] : memref<32x128xf32, #tpu.memory_space<vmem>>, vector<32x128xf32>
    %cst = arith.constant dense<0.000000e+00> : vector<8x128xf32>
    %14 = tpu.matmul %12, %13, %cst {dimension_numbers = #tpu.dot_dimension_numbers<[1], [0], [0], [1], [0, 0, 1, 1], [], []>} : vector<8x32xf32>, vector<32x128xf32>, vector<8x128xf32> -> vector<8x128xf32>
    %cst_15 = arith.constant 0.000000e+00 : f32
    %15 = vector.broadcast %cst_15 : f32 to vector<8x128xf32>
    %16 = arith.maximumf %14, %15 : vector<8x128xf32>
    %c0_16 = arith.constant 0 : index
    %c0_17 = arith.constant 0 : index
    %17 = vector.load %arg4[%c0_16, %c0_17] : memref<8x128xf32, #tpu.memory_space<vmem>>, vector<8x128xf32>
    tpu.vector_store %arg4[%c0_16, %c0_17], %16 {strides = array<i32>} : memref<8x128xf32, #tpu.memory_space<vmem>>, vector<8x128xf32>,
    return
  }
  func.func @transform_0(%arg0: i32) -> (i32, i32) {
    %c0_i32 = arith.constant 0 : i32
    %c0_i32_0 = arith.constant 0 : i32
    return %arg0, %c0_i32 : i32, i32
  }
  func.func @transform_1(%arg0: i32) -> (i32, i32) {
    %c0_i32 = arith.constant 0 : i32
    %c0_i32_0 = arith.constant 0 : i32
    return %arg0, %c0_i32 : i32, i32
  }
  func.func @transform_2(%arg0: i32) -> (i32, i32) {
    %c0_i32 = arith.constant 0 : i32
    %c0_i32_0 = arith.constant 0 : i32
    %c0_i32_1 = arith.constant 0 : i32
    return %c0_i32, %c0_i32_0 : i32, i32
  }
  func.func @transform_3(%arg0: i32) -> (i32, i32) {
    %c0_i32 = arith.constant 0 : i32
    %c0_i32_0 = arith.constant 0 : i32
    return %arg0, %c0_i32 : i32, i32
  }
}

</mosaic_0001>

<llo_original>
// kernel: tpu_custom_call.1
$region0: #{tpu_custom_call.1}
  #allocation0 [shape = 'u32[]', space=smem, size = 0x4, offset = 0x4, fixed_abs, tag = 'smem constant byte address 0x4 - core index']
  #allocation1 [shape = 'u32[144,128]{1,0:T(1,128)}', space=vmem, size = 0x12000, scoped, tag = 'internal scratch']
  #allocation2 [shape = 'f32[8,32]{1,0:T(8,128)}', space=vmem, size = 0x1000, scoped, tag = 'scratch operand']
  %s0 = inlined_call_operand.hbm [shape: f32[4,16], index: 0, kind: input, shape index: {}]
  %s1 = inlined_call_operand.hbm [shape: f32[4,80], index: 1, kind: input, shape index: {}]
  %s2 = inlined_call_operand.hbm [shape: f32[32,128], index: 2, kind: input, shape index: {}]
  %s3 = inlined_call_operand.hbm [shape: f32[4,128], index: 3, kind: output, shape index: {}]
  %s4 = sld [smem:[#allocation0]]
  $region34: #{tpu_custom_call.1} parent=0
    _
  %s6 = ssub.s32 1, %s4
  %s7 = scalar_select 0, %s6, %s4
  $region1: #{tpu_custom_call.1} parent=0
    #allocation3 [shape = 'u8[4096]{0}', space=vmem, size = 0x1000, scoped, tag = 'input window, operand 0, single buffered']
    #allocation4 [shape = 's32[1]{0}', space=sflag, size = 0x4, scoped, tag = 'scoped memory for tpu_custom_call.1']
    #allocation5 [shape = 's32[1]{0}', space=sflag, size = 0x4, scoped, tag = 'scoped memory for tpu_custom_call.1']
    #allocation6 [shape = 'u8[4096]{0}', space=vmem, size = 0x1000, scoped, tag = 'input window, operand 1, single buffered']
    #allocation7 [shape = 's32[1]{0}', space=sflag, size = 0x4, scoped, tag = 'scoped memory for tpu_custom_call.1']
    #allocation8 [shape = 'u8[16384]{0}', space=vmem, size = 0x4000, scoped, tag = 'input window, operand 2, single buffered']
    #allocation9 [shape = 'u8[4096]{0}', space=vmem, size = 0x1000, scoped, tag = 'output window, operand 0, single buffered']
    %8 = vsyncpa [#allocation4], 0
    %9 = vsyncpa [#allocation7], 0
    %10 = vsyncpa [#allocation5], 0
    // Predicated region
    $region2: #{tpu_custom_call.1} parent=1 // pred_check
      _
    $region3: #{tpu_custom_call.1} parent=1 // pred_check_branch
      %12 = sbr.rel (0) target = $region5
    $region4: #{tpu_custom_call.1} parent=1 // pred_region
      %s14 = ssub.s32 128, 64
      %15 = vsyncadd [#allocation4], %s14
      %s16 = sshll.u32 [#allocation3], 4
      %s17 = int_to_ptr.vmem [resolvable:$true] %s16
      %22 = dma.hbm_to_vmem [thread:$0]  %s0, 64, %s17, [#allocation4], 64, 64, 4
    $region5: #{tpu_custom_call.1} parent=1 // pred_fallthru
      _
    // Predicated region
    $region6: #{tpu_custom_call.1} parent=1 // pred_check
      _
    $region7: #{tpu_custom_call.1} parent=1 // pred_check_branch
      %24 = sbr.rel (0) target = $region9
    $region8: #{tpu_custom_call.1} parent=1 // pred_region
      %s26 = ssub.s32 128, 64
      %27 = vsyncadd [#allocation7], %s26
      %s28 = sshll.u32 [#allocation6], 4
      %s29 = int_to_ptr.vmem [resolvable:$true] %s28
      %34 = dma.hbm_to_vmem [thread:$0]  %s1, 64, %s29, [#allocation7], 64, 64, 4
    $region9: #{tpu_custom_call.1} parent=1 // pred_fallthru
      _
    // Predicated region
    $region10: #{tpu_custom_call.1} parent=1 // pred_check
      _
    $region11: #{tpu_custom_call.1} parent=1 // pred_check_branch
      %36 = sbr.rel (0) target = $region13
    $region12: #{tpu_custom_call.1} parent=1 // pred_region
      %s38 = ssub.s32 512, 512
      %39 = vsyncadd [#allocation7], %s38
      %s40 = sshll.u32 [#allocation8], 4
      %s41 = int_to_ptr.vmem [resolvable:$true] %s40
      %46 = dma.hbm_to_vmem [thread:$0]  %s2, 512, %s41, [#allocation7], 128, 128, 8
    $region13: #{tpu_custom_call.1} parent=1 // pred_fallthru
      _
    // Predicated region
    $region14: #{tpu_custom_call.1} parent=1 // pred_check
      _
    $region15: #{tpu_custom_call.1} parent=1 // pred_check_branch
      %48 = sbr.rel (0) target = $region17
    $region16: #{tpu_custom_call.1} parent=1 // pred_region
      %49 = dma.done [#allocation4], 128
    $region17: #{tpu_custom_call.1} parent=1 // pred_fallthru
      _
    // Predicated region
    $region18: #{tpu_custom_call.1} parent=1 // pred_check
      _
    $region19: #{tpu_custom_call.1} parent=1 // pred_check_branch
      %51 = sbr.rel (0) target = $region21
    $region20: #{tpu_custom_call.1} parent=1 // pred_region
      %52 = dma.done [#allocation7], 128
    $region21: #{tpu_custom_call.1} parent=1 // pred_fallthru
      _
    // Predicated region
    $region22: #{tpu_custom_call.1} parent=1 // pred_check
      _
    $region23: #{tpu_custom_call.1} parent=1 // pred_check_branch
      %54 = sbr.rel (0) target = $region25
    $region24: #{tpu_custom_call.1} parent=1 // pred_region
      %55 = dma.done [#allocation7], 512
    $region25: #{tpu_custom_call.1} parent=1 // pred_fallthru
      _
    %v56 = vld [vmem:[#allocation3] sm:$0xff]
    %vm57 = vcmask 130048
    %58 = vst.msk [vmem:[#allocation2] sm:$0xff] %vm57, %v56
    %v59 = vld [vmem:[#allocation6] sm:$0xff]
    %61 = vrot.lane.b32.xlu0 %v59, 112
    %v62 = vpop.permute.xlu0 %61
    %v64 = vadd.f32 %v59, %v62
    %65 = vrot.lane.b32.xlu0 %v59, 96
    %v66 = vpop.permute.xlu0 %65
    %v68 = vadd.f32 %v64, %v66
    %69 = vrot.lane.b32.xlu0 %v59, 80
    %v70 = vpop.permute.xlu0 %69
    %v72 = vadd.f32 %v68, %v70
    %73 = vrot.lane.b32.xlu0 %v59, 64
    %v74 = vpop.permute.xlu0 %73
    %v76 = vadd.f32 %v72, %v74
    %78 = vrot.lane.b32.xlu0 %v76, 16
    %v79 = vpop.permute.xlu0 %78
    %vm81 = vcmask 261248
    %82 = vst.msk [vmem:[#allocation2] sm:$0xff] %vm81, %v79
    %v83 = vld [vmem:[#allocation2] sm:$0xff]
    %v84 = vld [vmem:[#allocation8] sm:$0xff]
    %v85 = vld [vmem:[#allocation8 + $0x8] sm:$0xff]
    %v86 = vld [vmem:[#allocation8 + $0x10] sm:$0xff]
    %v87 = vld [vmem:[#allocation8 + $0x18] sm:$0xff]
    %vm88 = vcmask 261120
    %v90 = vsel %vm88, %v83, 0
    %92 = vmatprep.subr.mxu0 0.0
    %93 = vmatpush1.msra.mxu0 0.0
    %94 = vmatprep.subr.mxu0 0.0
    %95 = vmatpush1.msra.mxu0 0.0
    %96 = vmatprep.subr.mxu0 0.0
    %97 = vmatpush1.msra.mxu0 0.0
    %98 = vmatprep.subr.mxu0 0.0
    %99 = vmatpush1.msra.mxu0 0.0
    %100 = vmatprep.subr.mxu0 0.0
    %101 = vmatpush1.msra.mxu0 0.0
    %102 = vmatprep.subr.mxu0 0.0
    %103 = vmatpush1.msra.mxu0 0.0
    %104 = vmatprep.subr.mxu0 0.0
    %105 = vmatpush1.msra.mxu0 0.0
    %106 = vmatprep.subr.mxu0 0.0
    %107 = vmatpush1.msra.mxu0 0.0
    %108 = vmatprep.subr.mxu0 0.0
    %109 = vmatpush1.msra.mxu0 0.0
    %110 = vmatprep.subr.mxu0 0.0
    %111 = vmatpush1.msra.mxu0 0.0
    %112 = vmatprep.subr.mxu0 0.0
    %113 = vmatpush1.msra.mxu0 0.0
    %114 = vmatprep.subr.mxu0 0.0
    %115 = vmatpush1.msra.mxu0 0.0
    %116 = vmatprep.subr.mxu0 0.0
    %117 = vmatpush1.msra.mxu0 %v87
    %118 = vmatprep.subr.mxu0 0.0
    %119 = vmatpush1.msra.mxu0 %v86
    %120 = vmatprep.subr.mxu0 0.0
    %121 = vmatpush1.msra.mxu0 %v85
    %122 = vmatprep.subr.mxu0 0.0
    %123 = vmatpush1.msra.mxu0 %v84
    %124 = vmatprep.subr.mxu0 0.0
    %125 = vmatpush2.msra.mxu0 0.0
    %126 = vmatprep.subr.mxu0 0.0
    %127 = vmatpush2.msra.mxu0 0.0
    %128 = vmatprep.subr.mxu0 0.0
    %129 = vmatpush2.msra.mxu0 0.0
    %130 = vmatprep.subr.mxu0 0.0
    %131 = vmatpush2.msra.mxu0 0.0
    %132 = vmatprep.subr.mxu0 0.0
    %133 = vmatpush2.msra.mxu0 0.0
    %134 = vmatprep.subr.mxu0 0.0
    %135 = vmatpush2.msra.mxu0 0.0
    %136 = vmatprep.subr.mxu0 0.0
    %137 = vmatpush2.msra.mxu0 0.0
    %138 = vmatprep.subr.mxu0 0.0
    %139 = vmatpush2.msra.mxu0 0.0
    %140 = vmatprep.subr.mxu0 0.0
    %141 = vmatpush2.msra.mxu0 0.0
    %142 = vmatprep.subr.mxu0 0.0
    %143 = vmatpush2.msra.mxu0 0.0
    %144 = vmatprep.subr.mxu0 0.0
    %145 = vmatpush2.msra.mxu0 0.0
    %146 = vmatprep.subr.mxu0 0.0
    %147 = vmatpush2.msra.mxu0 0.0
    %148 = vmatprep.subr.mxu0 0.0
    %149 = vmatpush2.msra.mxu0 0.0
    %150 = vmatprep.subr.mxu0 0.0
    %151 = vmatpush2.msra.mxu0 0.0
    %152 = vmatprep.subr.mxu0 0.0
    %153 = vmatpush2.msra.mxu0 0.0
    %154 = vmatprep.subr.mxu0 0.0
    %155 = vmatpush2.msra.mxu0 0.0
    %156 = vmatprep.mubr.f32.mxu0 0.0
    %157 = vmatmul.mubr.f32.gmra.mxu0 %v90
    %v158 = vpop.f32.mrf.mxu0
    %v159 = vadd.f32 0.0, %v158
    %v160 = vpop.f32.mrf.mxu0
    %161 = vdwg.mxu0
    %v162 = vmax.f32 %v159, 0.0
    %163 = vst [vmem:[#allocation9] sm:$0xff] %v162
    // Predicated region
    $region26: #{tpu_custom_call.1} parent=1 // pred_check
      _
    $region27: #{tpu_custom_call.1} parent=1 // pred_check_branch
      %165 = sbr.rel (0) target = $region29
    $region28: #{tpu_custom_call.1} parent=1 // pred_region
      %s167 = ssub.s32 128, 64
      %168 = vsyncadd [#allocation5], %s167
      %s169 = sshll.u32 [#allocation9], 4
      %s170 = int_to_ptr.vmem [resolvable:$true] %s169
      %175 = dma.vmem_to_hbm [thread:$0]  %s170, 64, %s3, [#allocation5], 64, 64, 4
    $region29: #{tpu_custom_call.1} parent=1 // pred_fallthru
      _
    // Predicated region
    $region30: #{tpu_custom_call.1} parent=1 // pred_check
      _
    $region31: #{tpu_custom_call.1} parent=1 // pred_check_branch
      %177 = sbr.rel (0) target = $region33
    $region32: #{tpu_custom_call.1} parent=1 // pred_region
      %178 = dma.done [#allocation5], 128
    $region33: #{tpu_custom_call.1} parent=1 // pred_fallthru
      _
    %179 = vsyncpa [#allocation4], 1
    %180 = vsyncpa [#allocation7], 1
    %181 = vsyncpa [#allocation5], 1

</llo_original>
